<compile_context>
chip_gen: v7x
topology: tpu7x:2x2x1
jax: 0.10.0
libtpu: 0.0.40
codegen_flags: <defaults>
</compile_context>

<pallas_src>
import jax
import jax.numpy as jnp
from jax.experimental import pallas as pl
from jax.experimental.pallas import tpu as pltpu


LANE = 128
SUBLANE = 8
# 2 MiB f32 block: double-buffered input + output = 8 MiB of VMEM, inside the
# 16 MiB scoped default on v5e and well under v6e (32/128 MiB) and v7x (64 MiB).
_DEFAULT_BLOCK_BYTES = 2 * 1024 * 1024
# Target at least this many grid steps so the "parallel" axis can be sharded
# across the 2 TensorCores on v7x and the DMA pipeline stays busy.
_MIN_GRID_STEPS = 8
# Odd-sized inputs up to this many bytes run as one full-array block
# (full-dim block shape is exempt from the (8,128) divisibility rule).
_SINGLE_BLOCK_MAX_BYTES = 2 * 1024 * 1024
# Below this, a fused XLA elementwise op already hits HBM roofline with no
# launch / DMA-descriptor overhead.
_PALLAS_MIN_ELEMS = 1 << 20


def linear_kernel(wb_ref, x_ref, o_ref):
    # wb_ref: SMEM (2,) -> [weight, bias], resident across all grid steps.
    # x_ref/o_ref: VMEM (block_r, cols) lane-dense tiles.
    w = wb_ref[0]
    b = wb_ref[1]
    o_ref[...] = x_ref[...] * w + b


def _pack_wb(weight, bias, dtype):
    # Single tiny 1-D SMEM array (1-D => essentially no padding).
    return jnp.concatenate([weight.reshape(-1), bias.reshape(-1)]).astype(dtype)


def _run_slab(x_slab, wb, block_r, cols):
    rows = x_slab.shape[0]
    grid = (pl.cdiv(rows, block_r),)
    return pl.pallas_call(
        linear_kernel,
        out_shape=jax.ShapeDtypeStruct(x_slab.shape, x_slab.dtype),
        grid_spec=pl.GridSpec(
            grid=grid,
            in_specs=[
                pl.BlockSpec(memory_space=pltpu.MemorySpace.SMEM),   # wb (2,)
                pl.BlockSpec((block_r, cols), lambda i: (i, 0)),     # x tile
            ],
            out_specs=pl.BlockSpec((block_r, cols), lambda i: (i, 0)),
        ),
        compiler_params=pltpu.CompilerParams(
            # Row-tile axis is independent -> shard across both TCs on v7x.
            dimension_semantics=("parallel",),
        ),
    )(wb, x_slab)


def _choose_cols(n, max_lane_w):
    """Largest lane width (multiple of 128) that divides n, or None."""
    for c in (2048, 1024, 512, 256, 128):
        if c <= max_lane_w and n % c == 0:
            return c
    return None


def _choose_block_r(rows, cols, max_block_bytes, itemsize):
    # Preferred block rows from the VMEM budget (multiple of 8).
    pref = max(SUBLANE, (max_block_bytes // (itemsize * cols)) // SUBLANE * SUBLANE)
    # Shrink so the grid has at least _MIN_GRID_STEPS steps when rows allow.
    per_step = -(-rows // _MIN_GRID_STEPS)                     # ceil
    per_step = max(SUBLANE, -(-per_step // SUBLANE) * SUBLANE)  # round up to 8
    block_r = min(pref, per_step)
    if block_r >= rows:
        block_r = rows  # single full block (full-dim => exempt from 8-divisibility)
    return block_r


def _linear_pallas(x, weight, bias, *, max_block_bytes=_DEFAULT_BLOCK_BYTES,
                   max_lane_w=2048):
    orig_shape = x.shape
    dtype = x.dtype
    n = x.size
    itemsize = jnp.dtype(dtype).itemsize
    wb = _pack_wb(weight, bias, dtype)

    x_flat = x.reshape(-1)  # contiguous -> pure metadata op

    cols = _choose_cols(n, max_lane_w)
    if cols is not None:
        # Copy-free path: padded == n, so reshape in and out are metadata only.
        rows = n // cols
        block_r = _choose_block_r(rows, cols, max_block_bytes, itemsize)
        out = _run_slab(x_flat.reshape(rows, cols), wb, block_r, cols)
        return out.reshape(orig_shape)

    if n * itemsize <= _SINGLE_BLOCK_MAX_BYTES:
        # Small / odd-sized input: one block covering the full array.
        out = _run_slab(x_flat.reshape(1, n), wb, 1, n)
        return out.reshape(orig_shape)

    # Large input whose size is not a multiple of 128: pad only up to the next
    # multiple of `cols` (not a full tile).  Default dispatch prefers the XLA
    # path for this case; this branch only runs under force_pallas.
    cols = min(512, max_lane_w)
    rows = pl.cdiv(n, cols)
    padded = rows * cols
    x_slab = jnp.pad(x_flat, (0, padded - n)).reshape(rows, cols)
    block_r = _choose_block_r(rows, cols, max_block_bytes, itemsize)
    out = _run_slab(x_slab, wb, block_r, cols)
    return out.reshape(-1)[:n].reshape(orig_shape)


def linear_model(x, weight, bias, *, force_pallas=False,
                 max_block_bytes=_DEFAULT_BLOCK_BYTES, max_lane_w=2048):
    """x: (batch, 1) f32; weight: (1, 1); bias: (1,)  ->  (batch, 1)."""
    n = x.size
    needs_pad = (n % LANE != 0) and (n * jnp.dtype(x.dtype).itemsize
                                     > _SINGLE_BLOCK_MAX_BYTES)
    if not force_pallas and (n < _PALLAS_MIN_ELEMS or needs_pad):
        # Tiny batch, or padding would add HBM traffic: let XLA fuse it.
        return x * weight[0, 0] + bias[0]
    return _linear_pallas(x, weight, bias,
                          max_block_bytes=max_block_bytes, max_lane_w=max_lane_w)


if __name__ == "__main__":
    key = jax.random.PRNGKey(0)
    k_x, k_w, k_b, k_x2, k_x3 = jax.random.split(key, 5)

    # Deterministic parameters (PyTorch Linear(1,1) default init is uniform).
    weight = jax.random.uniform(k_w, (1, 1), dtype=jnp.float32, minval=-1.0, maxval=1.0)
    bias = jax.random.uniform(k_b, (1,), dtype=jnp.float32, minval=-1.0, maxval=1.0)

    # --- Check 1: small batch (shape implied by Linear(1,1)), forced kernel;
    #     exercises the single full-array-block path (no padding, no slicing).
    batch = 8
    x = jax.random.normal(k_x, (batch, 1), dtype=jnp.float32)
    y = linear_model(x, weight, bias, force_pallas=True)
    jax.block_until_ready(y)
    y_ref = x @ weight.T + bias
    assert y.shape == (batch, 1)
    assert jnp.allclose(y, y_ref, atol=1e-6), "mismatch vs reference (small batch)"

    # --- Check 2: multiple-of-128 batch -> copy-free lane-dense tiled path;
    #     small caps force several pipelined grid steps.
    batch2 = 4096
    x2 = jax.random.normal(k_x2, (batch2, 1), dtype=jnp.float32)
    y2 = linear_model(x2, weight, bias, force_pallas=True,
                      max_lane_w=128, max_block_bytes=8 * 128 * 4)
    jax.block_until_ready(y2)
    y2_ref = x2 @ weight.T + bias
    assert y2.shape == (batch2, 1)
    assert jnp.allclose(y2, y2_ref, atol=1e-6), "mismatch vs reference (tiled batch)"

    # --- Check 3: ragged last grid step (rows not divisible by block_r) on a
    #     copy-free slab -- Pallas masks the overhanging rows, still no pad/slice.
    batch3 = 4224  # 33 rows of 128; block_r = 8 -> 5 steps, last one partial
    x3 = jax.random.normal(k_x3, (batch3, 1), dtype=jnp.float32)
    y3 = linear_model(x3, weight, bias, force_pallas=True,
                      max_lane_w=128, max_block_bytes=8 * 128 * 4)
    jax.block_until_ready(y3)
    y3_ref = x3 @ weight.T + bias
    assert y3.shape == (batch3, 1)
    assert jnp.allclose(y3, y3_ref, atol=1e-6), "mismatch vs reference (ragged batch)"

    print("KERNEL_OK")
</pallas_src>

<mosaic_0001>
module attributes {stable_mosaic.version = 11 : i64} {
  func.func @linear_kernel(%arg0: i32, %arg1: memref<2xf32, #tpu.memory_space<smem>>, %arg2: memref<1x8xf32, #tpu.memory_space<vmem>>, %arg3: memref<1x8xf32, #tpu.memory_space<vmem>>) attributes {dimension_semantics = [#tpu.dimension_semantics<parallel>], iteration_bounds = array<i64: 1>, scalar_prefetch = 0 : i64, scratch_operands = 0 : i64, tpu.core_type = #tpu.core_type<tc>, window_params = [{transform_indices = @transform_0, window_bounds = array<i64: 2>}, {transform_indices = @transform_1, window_bounds = array<i64: 1, 8>}, {transform_indices = @transform_2, window_bounds = array<i64: 1, 8>}]} {
    %c0 = arith.constant 0 : index
    %0 = memref.load %arg1[%c0] : memref<2xf32, #tpu.memory_space<smem>>
    %c1 = arith.constant 1 : index
    %1 = memref.load %arg1[%c1] : memref<2xf32, #tpu.memory_space<smem>>
    %c0_0 = arith.constant 0 : index
    %c0_1 = arith.constant 0 : index
    %2 = vector.load %arg2[%c0_0, %c0_1] : memref<1x8xf32, #tpu.memory_space<vmem>>, vector<1x8xf32>
    %3 = vector.broadcast %0 : f32 to vector<1x8xf32>
    %4 = arith.mulf %2, %3 : vector<1x8xf32>
    %5 = vector.broadcast %1 : f32 to vector<1x8xf32>
    %6 = arith.addf %4, %5 : vector<1x8xf32>
    %c0_2 = arith.constant 0 : index
    %c0_3 = arith.constant 0 : index
    %7 = vector.load %arg3[%c0_2, %c0_3] : memref<1x8xf32, #tpu.memory_space<vmem>>, vector<1x8xf32>
    tpu.vector_store %arg3[%c0_2, %c0_3], %6 {strides = array<i32>} : memref<1x8xf32, #tpu.memory_space<vmem>>, vector<1x8xf32>,
    return
  }
  func.func @transform_0(%arg0: i32) -> i32 {
    %c0_i32 = arith.constant 0 : i32
    %c0_i32_0 = arith.constant 0 : i32
    return %c0_i32 : i32
  }
  func.func @transform_1(%arg0: i32) -> (i32, i32) {
    %c0_i32 = arith.constant 0 : i32
    %c0_i32_0 = arith.constant 0 : i32
    return %arg0, %c0_i32 : i32, i32
  }
  func.func @transform_2(%arg0: i32) -> (i32, i32) {
    %c0_i32 = arith.constant 0 : i32
    %c0_i32_0 = arith.constant 0 : i32
    return %arg0, %c0_i32 : i32, i32
  }
}

</mosaic_0001>

<llo_original>
// kernel: tpu_custom_call.1
$region0: #{tpu_custom_call.1}
  #allocation0 [shape = 'u32[]', space=smem, size = 0x4, offset = 0x4, fixed_abs, tag = 'smem constant byte address 0x4 - core index']
  #allocation1 [shape = 'u32[144,128]{1,0:T(1,128)}', space=vmem, size = 0x12000, scoped, tag = 'internal scratch']
  %s0 = inlined_call_operand.hbm [shape: f32[2], index: 0, kind: input, shape index: {}]
  %s1 = inlined_call_operand.vmem [shape: f32[1,8], index: 1, kind: input, shape index: {}]
  %s2 = inlined_call_operand.hbm [shape: f32[1,8], index: 2, kind: output, shape index: {}]
  %s3 = sld [smem:[#allocation0]]
  $region22: #{tpu_custom_call.1} parent=0
    _
  %s5 = ssub.s32 1, %s3
  %s6 = scalar_select 0, %s5, %s3
  $region1: #{tpu_custom_call.1} parent=0
    #allocation2 [shape = 'u8[512]{0}', space=smem, size = 0x200, scoped, tag = 'input window, operand 0, single buffered']
    #allocation3 [shape = 's32[1]{0}', space=sflag, size = 0x4, scoped, tag = 'scoped memory for tpu_custom_call.1']
    #allocation4 [shape = 's32[1]{0}', space=sflag, size = 0x4, scoped, tag = 'scoped memory for tpu_custom_call.1']
    #allocation5 [shape = 'u8[512]{0}', space=vmem, size = 0x400, scoped, tag = 'output window, operand 0, single buffered']
    %7 = vsyncpa [#allocation4], 0
    %8 = vsyncpa [#allocation3], 0
    // Predicated region
    $region2: #{tpu_custom_call.1} parent=1 // pred_check
      _
    $region3: #{tpu_custom_call.1} parent=1 // pred_check_branch
      %10 = sbr.rel (0) target = $region5
    $region4: #{tpu_custom_call.1} parent=1 // pred_region
      %s12 = ssub.s32 16, 16
      %13 = vsyncadd [#allocation4], %s12
      %16 = dma.hbm_to_smem %s0, 16, [#allocation2], [#allocation4]
    $region5: #{tpu_custom_call.1} parent=1 // pred_fallthru
      _
    // Predicated region
    $region6: #{tpu_custom_call.1} parent=1 // pred_check
      _
    $region7: #{tpu_custom_call.1} parent=1 // pred_check_branch
      %18 = sbr.rel (0) target = $region9
    $region8: #{tpu_custom_call.1} parent=1 // pred_region
      _
    $region9: #{tpu_custom_call.1} parent=1 // pred_fallthru
      _
    // Predicated region
    $region10: #{tpu_custom_call.1} parent=1 // pred_check
      _
    $region11: #{tpu_custom_call.1} parent=1 // pred_check_branch
      %20 = sbr.rel (0) target = $region13
    $region12: #{tpu_custom_call.1} parent=1 // pred_region
      %21 = dma.done [#allocation4], 16
    $region13: #{tpu_custom_call.1} parent=1 // pred_fallthru
      _
    %22 = sfence
    %s23 = sld [smem:[#allocation2]]
    %s24 = sld [smem:[#allocation2 + $0x1]]
    %v25 = vld [vmem:[%s1] sm:$0x1]
    %v26 = vstv %s23
    %v27 = vmul.f32 %v25, %v26
    %v28 = vstv %s24
    %v29 = vadd.f32 %v27, %v28
    %vm30 = vcmask 57344
    %31 = vst.msk [vmem:[#allocation5] sm:$0x1] %vm30, %v29
    // Predicated region
    $region14: #{tpu_custom_call.1} parent=1 // pred_check
      _
    $region15: #{tpu_custom_call.1} parent=1 // pred_check_branch
      %33 = sbr.rel (0) target = $region17
    $region16: #{tpu_custom_call.1} parent=1 // pred_region
      %s35 = ssub.s32 16, 16
      %36 = vsyncadd [#allocation3], %s35
      %s38 = sshll.u32 [#allocation5], 4
      %s39 = int_to_ptr.vmem [resolvable:$true] %s38
      %41 = dma.vmem_to_hbm [thread:$0]  %s39, 16, %s2, [#allocation3]
    $region17: #{tpu_custom_call.1} parent=1 // pred_fallthru
      _
    // Predicated region
    $region18: #{tpu_custom_call.1} parent=1 // pred_check
      _
    $region19: #{tpu_custom_call.1} parent=1 // pred_check_branch
      %43 = sbr.rel (0) target = $region21
    $region20: #{tpu_custom_call.1} parent=1 // pred_region
      %44 = dma.done [#allocation3], 16
    $region21: #{tpu_custom_call.1} parent=1 // pred_fallthru
      _
    %45 = vsyncpa [#allocation3], 1
    %46 = vsyncpa [#allocation4], 1

</llo_original>
